<compile_context>
chip_gen: v5e
topology: v5e:2x2
jax: 0.10.0
libtpu: 0.0.40
codegen_flags: <defaults>
</compile_context>

<pallas_src>
import jax
import jax.numpy as jnp
import numpy as np
from jax.experimental import pallas as pl
from jax.experimental.pallas import tpu as pltpu


def _avgpoolpad_kernel(x_ref, k_ref, o_ref):
    # x_ref: (1, TC, H*W)       TC channel planes, spatial flattened onto lanes
    # k_ref: (H*W, Hout*Wout)   fused pool-weights / divisor matrix (resident)
    # o_ref: (1, TC, Hout*Wout) lane-dense output slab
    x = x_ref[0].astype(jnp.float32)
    o_ref[0] = jnp.dot(x, k_ref[...],
                       preferred_element_type=jnp.float32).astype(o_ref.dtype)


def _pool_matrix(size, out):
    # P[j, r] = 1 if r in [2j, 2j+2]  (windows clipped to [0, size) by r range)
    r = np.arange(size)[None, :]
    j = np.arange(out)[:, None]
    return ((r >= 2 * j) & (r <= 2 * j + 2)).astype(np.float64)


def _pick_channel_tile(N, C, H, W, itemsize, max_block_bytes=2 << 20):
    # TC must divide C and be either == C or a multiple of 8 (block-shape rule).
    cands = [d for d in range(1, C + 1)
             if C % d == 0 and (d == C or d % 8 == 0)]
    fitting = [d for d in cands if d * H * W * itemsize <= max_block_bytes]
    tc = max(fitting) if fitting else min(cands)
    # keep >= 2 total grid steps when possible (v7x has 2 TensorCores/chip)
    if N * (C // tc) < 2:
        smaller = [d for d in (fitting or cands) if d < tc]
        if smaller:
            tc = max(smaller)
    return tc


def avg_pool_pad(x):
    """Forward pass of AvgPoolPad. x: (N, C, H, W) -> (N, C, H//2, W//2)."""
    N, C, H, W = x.shape
    Hout, Wout = H // 2, W // 2
    HWo = Hout * Wout
    itemsize = jnp.dtype(x.dtype).itemsize
    TC = _pick_channel_tile(N, C, H, W, itemsize)

    # Fused pooling matrix: rows of Ph/Pw are pre-divided by their window
    # counts (count_include_pad=False divisor), then combined via Kronecker
    # product so one matmul does window-sum + normalization.
    ph = _pool_matrix(H, Hout)                              # (Hout, H)
    pw = _pool_matrix(W, Wout)                              # (Wout, W)
    phs = ph / ph.sum(axis=1, keepdims=True)
    pws = pw / pw.sum(axis=1, keepdims=True)
    k_np = np.kron(phs, pws).T                              # (H*W, Hout*Wout)
    k = jnp.asarray(k_np, dtype=jnp.float32)

    x3 = x.reshape(N, C, H * W)                             # free reshape

    # Explicit VMEM budget (v7x-safe): double-buffered in/out blocks + K.
    lane_pad = lambda n: ((n + 127) // 128) * 128
    sub_pad = lambda n: ((n + 7) // 8) * 8
    in_blk = sub_pad(TC) * lane_pad(H * W) * itemsize
    out_blk = sub_pad(TC) * lane_pad(HWo) * itemsize
    k_bytes = sub_pad(H * W) * lane_pad(HWo) * 4
    vmem_limit = int(min(max(2 * (in_blk + out_blk + k_bytes) + (4 << 20),
                             16 << 20), 48 << 20))

    cost = pl.CostEstimate(
        flops=2 * N * C * H * W * HWo,
        transcendentals=0,
        bytes_accessed=N * C * (H * W + HWo) * itemsize + H * W * HWo * 4)

    out = pl.pallas_call(
        _avgpoolpad_kernel,
        out_shape=jax.ShapeDtypeStruct((N, C, HWo), x.dtype),
        grid_spec=pltpu.PrefetchScalarGridSpec(
            num_scalar_prefetch=0,
            grid=(N, C // TC),
            in_specs=[
                pl.BlockSpec((1, TC, H * W), lambda n, c: (n, c, 0)),
                # constant block index -> DMA'd once, stays VMEM-resident
                pl.BlockSpec((H * W, HWo), lambda n, c: (0, 0)),
            ],
            out_specs=pl.BlockSpec((1, TC, HWo), lambda n, c: (n, c, 0)),
        ),
        compiler_params=pltpu.CompilerParams(
            dimension_semantics=("parallel", "parallel"),
            vmem_limit_bytes=vmem_limit),
        cost_estimate=cost,
    )(x3, k)

    return out.reshape(N, C, Hout, Wout)                    # free reshape


def _ref_avgpoolpad(xn):
    # Pure-numpy reference reproducing the PyTorch semantics.
    N, C, H, W = xn.shape
    Hout, Wout = H // 2, W // 2
    xp = np.pad(xn.astype(np.float64), ((0, 0), (0, 0), (0, 2), (0, 2)))
    s = np.zeros((N, C, Hout, Wout), dtype=np.float64)
    cnt = np.zeros((Hout, Wout), dtype=np.float64)
    for kh in range(3):
        for kw in range(3):
            s += xp[:, :, kh:kh + 2 * Hout:2, kw:kw + 2 * Wout:2]
            vh = (2 * np.arange(Hout) + kh) < H
            vw = (2 * np.arange(Wout) + kw) < W
            cnt += vh[:, None].astype(np.float64) * vw[None, :].astype(np.float64)
    return (s / cnt).astype(xn.dtype)


if __name__ == "__main__":
    key = jax.random.PRNGKey(0)
    x = jax.random.normal(key, (2, 4, 16, 16), dtype=jnp.float32)

    out = avg_pool_pad(x)
    out = jax.block_until_ready(out)

    ref = _ref_avgpoolpad(np.asarray(x))
    np.testing.assert_allclose(np.asarray(out), ref, rtol=1e-5, atol=1e-5)
    print("KERNEL_OK")
</pallas_src>

<mosaic_0001>
module attributes {stable_mosaic.version = 11 : i64} {
  func.func @_avgpoolpad_kernel(%arg0: i32, %arg1: i32, %arg2: memref<1x4x256xf32, #tpu.memory_space<vmem>>, %arg3: memref<256x64xf32, #tpu.memory_space<vmem>>, %arg4: memref<1x4x64xf32, #tpu.memory_space<vmem>>) attributes {dimension_semantics = [#tpu.dimension_semantics<parallel>, #tpu.dimension_semantics<parallel>], iteration_bounds = array<i64: 2, 1>, scalar_prefetch = 0 : i64, scratch_operands = 0 : i64, tpu.core_type = #tpu.core_type<tc>, window_params = [{transform_indices = @transform_0, window_bounds = array<i64: 1, 4, 256>}, {pipeline_mode = #tpu.pipeline_mode<synchronous>, transform_indices = @transform_1, window_bounds = array<i64: 256, 64>}, {transform_indices = @transform_2, window_bounds = array<i64: 1, 4, 64>}]} {
    %c0 = arith.constant 0 : index
    %c0_0 = arith.constant 0 : index
    %c0_1 = arith.constant 0 : index
    %0 = vector.load %arg2[%c0, %c0_0, %c0_1] : memref<1x4x256xf32, #tpu.memory_space<vmem>>, vector<1x4x256xf32>
    %1 = vector.shape_cast %0 : vector<1x4x256xf32> to vector<4x256xf32>
    %c0_2 = arith.constant 0 : index
    %c0_3 = arith.constant 0 : index
    %2 = vector.load %arg3[%c0_2, %c0_3] : memref<256x64xf32, #tpu.memory_space<vmem>>, vector<256x64xf32>
    %cst = arith.constant dense<0.000000e+00> : vector<4x64xf32>
    %3 = tpu.matmul %1, %2, %cst {dimension_numbers = #tpu.dot_dimension_numbers<[1], [0], [0], [1], [0, 0, 1, 1], [], []>} : vector<4x256xf32>, vector<256x64xf32>, vector<4x64xf32> -> vector<4x64xf32>
    %c0_4 = arith.constant 0 : index
    %c0_5 = arith.constant 0 : index
    %c0_6 = arith.constant 0 : index
    %4 = vector.load %arg4[%c0_4, %c0_5, %c0_6] : memref<1x4x64xf32, #tpu.memory_space<vmem>>, vector<1x4x64xf32>
    %5 = vector.shape_cast %4 : vector<1x4x64xf32> to vector<4x64xf32>
    %6 = vector.shape_cast %3 : vector<4x64xf32> to vector<1x4x64xf32>
    tpu.vector_store %arg4[%c0_4, %c0_5, %c0_6], %6 {strides = array<i32>} : memref<1x4x64xf32, #tpu.memory_space<vmem>>, vector<1x4x64xf32>,
    return
  }
  func.func @transform_0(%arg0: i32, %arg1: i32) -> (i32, i32, i32) {
    %c0_i32 = arith.constant 0 : i32
    %c0_i32_0 = arith.constant 0 : i32
    return %arg0, %arg1, %c0_i32 : i32, i32, i32
  }
  func.func @transform_1(%arg0: i32, %arg1: i32) -> (i32, i32) {
    %c0_i32 = arith.constant 0 : i32
    %c0_i32_0 = arith.constant 0 : i32
    %c0_i32_1 = arith.constant 0 : i32
    return %c0_i32, %c0_i32_0 : i32, i32
  }
  func.func @transform_2(%arg0: i32, %arg1: i32) -> (i32, i32, i32) {
    %c0_i32 = arith.constant 0 : i32
    %c0_i32_0 = arith.constant 0 : i32
    return %arg0, %arg1, %c0_i32 : i32, i32, i32
  }
}

</mosaic_0001>

<llo_original>
// kernel: tpu_custom_call.1
$region0: #{tpu_custom_call.1}
  #allocation0 [shape = 'u32[]', space=smem, size = 0x4, offset = 0x4, fixed_abs, tag = 'smem constant byte address 0x4 - core index']
  #allocation1 [shape = 'u32[72,128]{1,0:T(1,128)}', space=vmem, size = 0x9000, scoped, tag = 'internal scratch']
  %s0 = inlined_call_operand.vmem [shape: f32[2,4,256], index: 0, kind: input, shape index: {}]
  %s1 = inlined_call_operand.vmem [shape: f32[256,64], index: 1, kind: input, shape index: {}]
  %s2 = inlined_call_operand.hbm [shape: f32[2,4,64], index: 2, kind: output, shape index: {}]
  %s3 = sld [smem:[#allocation0]]
  $region41: #{tpu_custom_call.1} parent=0
    _
  %s5 = ssub.s32 1, %s3
  %s6 = scalar_select 0, %s5, %s3
  $region1: #{tpu_custom_call.1} parent=0
    #allocation2 [shape = 'u8[4096]{0}', space=vmem, size = 0x1000, scoped, tag = 'output window, operand 0']
    #allocation3 [shape = 's32[2]{0}', space=sflag, size = 0x8, scoped, tag = 'scoped memory for tpu_custom_call.1']
    %7 = vsyncpa [#allocation3], 0
    %s8 = scalar_lea.sflag [#allocation3], 1
    %9 = vsyncpa %s8, 0
    loop: start=0, step=1, limit=4
    $region2: #{tpu_custom_call.1} parent=1 // loop_pre_header
      _
    $region3: #{tpu_custom_call.1} parent=1 // loop_header
      %s11 = sphi 0, %s15
      %p12 = scmp.ge.s32.totalorder %s11, 4
      %s18 = sphi 0, %s30
      %s19 = sphi 0, %s26
      %s20 = sphi 0, %s18
      %s21 = sphi 0, %s19
      %s22 = sphi 0, %s20
      %s23 = sphi 0, %s21
      %s35 = sphi 0, %s37
      %s38 = sphi 0, %s35
      %s39 = sphi 0, %s38
      %s55 = sphi 0, %s39
      %s59 = sphi 0, %s59
      %s61 = sphi 0, %s59
      %s62 = sphi 0, %s61
      %s76 = sphi 0, %s62
      %s84 = sphi 0, %s86
      %s87 = sphi 0, %s84
      %s88 = sphi 0, %s87
      %s104 = sphi 0, %s88
    $region4: #{tpu_custom_call.1} parent=1 // loop_header_branch
      %14 = sbr.rel (%p12) target = $region8
    $region5: #{tpu_custom_call.1} parent=1 // loop_body
      %s16 = ssub.s32 %s11, 1
      %s17 = ssub.s32 %s11, 2
      %s24 = sadd.s32 1, %s19
      %p25 = scmp.ge.s32.totalorder %s24, 1
      %s26 = scalar_select %p25, 0, %s24
      %s27 = sadd.s32 1, %s18
      %s28 = scalar_select %p25, %s27, %s18
      %p29 = scmp.ge.s32.totalorder %s28, 2
      %s30 = scalar_select %p29, 0, %s28
      %s31 = ssub.s32 %s18, %s30
      %s32 = ssub.s32 %s19, %s26
      %s33 = sor.u32 %s31, %s32
      %p34 = scmp.eq.s32.totalorder %s33, 0
      %s36 = sadd.s32 %s35, 1
      %s37 = scalar_select %p34, %s35, %s36
      %p40 = pneg %p34
      %p41 = scmp.eq.s32.totalorder %s11, 1
      %p42 = por %p40, %p41
      %p43 = scmp.ne.s32.totalorder %s35, %s38
      %p44 = scmp.eq.s32.totalorder %s11, 0
      %p45 = por %p43, %p44
      %p46 = scmp.ne.s32.totalorder %s35, %s38
      %p47 = scmp.eq.s32.totalorder %s16, 1
      %p48 = por %p46, %p47
      %p49 = scmp.ne.s32.totalorder %s38, %s39
      %p50 = scmp.eq.s32.totalorder %s16, 0
      %p51 = por %p49, %p50
      %p52 = scmp.ne.s32.totalorder %s38, %s39
      %p53 = scmp.eq.s32.totalorder %s17, 1
      %p54 = por %p52, %p53
      %p56 = scmp.ne.s32.totalorder %s39, %s55
      %p57 = scmp.eq.s32.totalorder %s17, 0
      %p58 = por %p56, %p57
      %s60 = sadd.s32 %s59, 1
      %p63 = scmp.eq.s32.totalorder %s11, 1
      %p64 = scmp.ne.s32.totalorder %s59, %s61
      %p65 = scmp.eq.s32.totalorder %s11, 0
      %p66 = por %p64, %p65
      %p67 = scmp.ne.s32.totalorder %s59, %s61
      %p68 = scmp.eq.s32.totalorder %s16, 1
      %p69 = por %p67, %p68
      %p70 = scmp.ne.s32.totalorder %s61, %s62
      %p71 = scmp.eq.s32.totalorder %s16, 0
      %p72 = por %p70, %p71
      %p73 = scmp.ne.s32.totalorder %s61, %s62
      %p74 = scmp.eq.s32.totalorder %s17, 1
      %p75 = por %p73, %p74
      %p77 = scmp.ne.s32.totalorder %s62, %s76
      %p78 = scmp.eq.s32.totalorder %s17, 0
      %p79 = por %p77, %p78
      %s80 = ssub.s32 %s18, %s30
      %s81 = ssub.s32 %s19, %s26
      %s82 = sor.u32 %s80, %s81
      %p83 = scmp.eq.s32.totalorder %s82, 0
      %s85 = sadd.s32 %s84, 1
      %s86 = scalar_select %p83, %s84, %s85
      %p89 = pneg %p83
      %p90 = scmp.eq.s32.totalorder %s11, 1
      %p91 = por %p89, %p90
      %p92 = scmp.ne.s32.totalorder %s84, %s87
      %p93 = scmp.eq.s32.totalorder %s11, 0
      %p94 = por %p92, %p93
      %p95 = scmp.ne.s32.totalorder %s84, %s87
      %p96 = scmp.eq.s32.totalorder %s16, 1
      %p97 = por %p95, %p96
      %p98 = scmp.ne.s32.totalorder %s87, %s88
      %p99 = scmp.eq.s32.totalorder %s16, 0
      %p100 = por %p98, %p99
      %p101 = scmp.ne.s32.totalorder %s87, %s88
      %p102 = scmp.eq.s32.totalorder %s17, 1
      %p103 = por %p101, %p102
      %p105 = scmp.ne.s32.totalorder %s88, %s104
      %p106 = scmp.eq.s32.totalorder %s17, 0
      %p107 = por %p105, %p106
      %p108 = scmp.le.s32.totalorder 1, %s11
      %p109 = scmp.lt.s32.totalorder %s11, 3
      %p110 = pnand %p108, %p109
      %p111 = pneg %p110
      // Predicated region
      $region9: #{tpu_custom_call.1} parent=5 // pred_check
        _
      $region10: #{tpu_custom_call.1} parent=5 // pred_check_branch
        %113 = sbr.rel (%p110) target = $region12
      $region11: #{tpu_custom_call.1} parent=5 // pred_region
        %s114 = ssub.s32 %s11, 1
        // Predicated region
        $region13: #{tpu_custom_call.1} parent=11 // pred_check
          %p115 = pneg %p72
        $region14: #{tpu_custom_call.1} parent=11 // pred_check_branch
          %117 = sbr.rel (%p115) target = $region16
        $region15: #{tpu_custom_call.1} parent=11 // pred_region
          _
        $region16: #{tpu_custom_call.1} parent=11 // pred_fallthru
          _
      $region12: #{tpu_custom_call.1} parent=5 // pred_fallthru
        _
      %p118 = scmp.lt.s32.totalorder %s11, 2
      // Predicated region
      $region17: #{tpu_custom_call.1} parent=5 // pred_check
        %p119 = pneg %p118
      $region18: #{tpu_custom_call.1} parent=5 // pred_check_branch
        %121 = sbr.rel (%p119) target = $region20
      $region19: #{tpu_custom_call.1} parent=5 // pred_region
        // Predicated region
        $region21: #{tpu_custom_call.1} parent=19 // pred_check
          %p122 = pneg %p45
        $region22: #{tpu_custom_call.1} parent=19 // pred_check_branch
          %124 = sbr.rel (%p122) target = $region24
        $region23: #{tpu_custom_call.1} parent=19 // pred_region
          %p125 = scmp.lt.s32.totalorder %s18, 1
          %s126 = scalar_select %p125, %s18, 1
          %p127 = scmp.lt.s32.totalorder %s19, 0
          %s128 = scalar_select %p127, %s19, 0
          %s129 = smul.addr %s128, 2
          %s130 = smul.addr %s126, 2
          %s131 = sadd.s32 %s129, %s130
          %s132 = smul.addr %s131, 4
          %s133 = scalar_lea.vmem %s0, %s132
        $region24: #{tpu_custom_call.1} parent=19 // pred_fallthru
          _
      $region20: #{tpu_custom_call.1} parent=5 // pred_fallthru
        _
      %p134 = scmp.le.s32.totalorder 1, %s11
      %p135 = scmp.lt.s32.totalorder %s11, 3
      %p136 = pnand %p134, %p135
      %p137 = pneg %p136
      // Predicated region
      $region25: #{tpu_custom_call.1} parent=5 // pred_check
        _
      $region26: #{tpu_custom_call.1} parent=5 // pred_check_branch
        %139 = sbr.rel (%p136) target = $region28
      $region27: #{tpu_custom_call.1} parent=5 // pred_region
        %s140 = ssub.s32 %s11, 1
        %p141 = scmp.lt.s32.totalorder %s20, 1
        %s142 = scalar_select %p141, %s20, 1
        %p143 = scmp.lt.s32.totalorder %s21, 0
        %s144 = scalar_select %p143, %s21, 0
        %s145 = smul.addr %s144, 2
        %s146 = smul.addr %s142, 2
        %s147 = sadd.s32 %s145, %s146
        %s148 = smul.addr %s147, 4
        %s149 = scalar_lea.vmem %s0, %s148
        %p150 = pneg %p51
        %p151 = pneg %p48
        %p152 = pneg %p72
        %p153 = pneg %p69
        %p154 = pneg %p100
        %p155 = pneg %p97
        %s156 = sand.u32 %s87, 1
        %s157 = scalar_lea.sflag [#allocation3], %s156
        %s158 = sand.u32 %s87, 1
        %s159 = smul.addr %s158, 4
        %s160 = scalar_lea.vmem [#allocation2], %s159
        %p161 = scmp.lt.s32.totalorder %s20, 1
        %s162 = scalar_select %p161, %s20, 1
        %p163 = scmp.lt.s32.totalorder %s21, 0
        %s164 = scalar_select %p163, %s21, 0
        %s165 = smul.addr %s164, 2
        %s166 = smul.addr %s162, 2
        %s167 = sadd.s32 %s165, %s166
        %s168 = smul.addr %s167, 4
        %s169 = scalar_lea.vmem %s0, %s168
        %v170 = vld [vmem:[%s169] sm:$0xff]
        %v171 = vld [vmem:[%s1] sm:$0xff]
        %v172 = vld [vmem:[%s1 + $0x8] sm:$0xff]
        %v173 = vld [vmem:[%s1 + $0x10] sm:$0xff]
        %v174 = vld [vmem:[%s1 + $0x18] sm:$0xff]
        %v175 = vld [vmem:[%s1 + $0x20] sm:$0xff]
        %v176 = vld [vmem:[%s1 + $0x28] sm:$0xff]
        %v177 = vld [vmem:[%s1 + $0x30] sm:$0xff]
        %v178 = vld [vmem:[%s1 + $0x38] sm:$0xff]
        %v179 = vld [vmem:[%s1 + $0x40] sm:$0xff]
        %v180 = vld [vmem:[%s1 + $0x48] sm:$0xff]
        %v181 = vld [vmem:[%s1 + $0x50] sm:$0xff]
        %v182 = vld [vmem:[%s1 + $0x58] sm:$0xff]
        %v183 = vld [vmem:[%s1 + $0x60] sm:$0xff]
        %v184 = vld [vmem:[%s1 + $0x68] sm:$0xff]
        %v185 = vld [vmem:[%s1 + $0x70] sm:$0xff]
        %v186 = vld [vmem:[%s1 + $0x78] sm:$0xff]
        %v187 = vld [vmem:[%s1 + $0x80] sm:$0xff]
        %v188 = vld [vmem:[%s1 + $0x88] sm:$0xff]
        %v189 = vld [vmem:[%s1 + $0x90] sm:$0xff]
        %v190 = vld [vmem:[%s1 + $0x98] sm:$0xff]
        %v191 = vld [vmem:[%s1 + $0xa0] sm:$0xff]
        %v192 = vld [vmem:[%s1 + $0xa8] sm:$0xff]
        %v193 = vld [vmem:[%s1 + $0xb0] sm:$0xff]
        %v194 = vld [vmem:[%s1 + $0xb8] sm:$0xff]
        %v195 = vld [vmem:[%s1 + $0xc0] sm:$0xff]
        %v196 = vld [vmem:[%s1 + $0xc8] sm:$0xff]
        %v197 = vld [vmem:[%s1 + $0xd0] sm:$0xff]
        %v198 = vld [vmem:[%s1 + $0xd8] sm:$0xff]
        %v199 = vld [vmem:[%s1 + $0xe0] sm:$0xff]
        %v200 = vld [vmem:[%s1 + $0xe8] sm:$0xff]
        %v201 = vld [vmem:[%s1 + $0xf0] sm:$0xff]
        %v202 = vld [vmem:[%s1 + $0xf8] sm:$0xff]
        %204 = vst [vmem:[#allocation1] ss:$2 sm:$0xff] %v170
        %v205 = vld.sshfl [vmem:[#allocation1] sm:$0xff pattern:$0x75316420]
        %v206 = vld.sshfl [vmem:[#allocation1 + $0x8] sm:$0xff pattern:$0x75316420]
        %209 = vmatpush.msra.mxu0 %v186
        %210 = vmatpush.msra.mxu0 %v185
        %211 = vmatpush.msra.mxu0 %v184
        %212 = vmatpush.msra.mxu0 %v183
        %213 = vmatpush.msra.mxu0 %v182
        %214 = vmatpush.msra.mxu0 %v181
        %215 = vmatpush.msra.mxu0 %v180
        %216 = vmatpush.msra.mxu0 %v179
        %217 = vmatpush.msra.mxu0 %v178
        %218 = vmatpush.msra.mxu0 %v177
        %219 = vmatpush.msra.mxu0 %v176
        %220 = vmatpush.msra.mxu0 %v175
        %221 = vmatpush.msra.mxu0 %v174
        %222 = vmatpush.msra.mxu0 %v173
        %223 = vmatpush.msra.mxu0 %v172
        %224 = vmatpush.msra.mxu0 %v171
        %225 = vmatmul.f32.gmra.mxu0 %v205
        %v226 = vpop.f32.mrf.mxu0
        %v227 = vadd.f32 0.0, %v226
        %228 = vdwg.mxu0
        %229 = vmatpush.msra.mxu0 %v202
        %230 = vmatpush.msra.mxu0 %v201
        %231 = vmatpush.msra.mxu0 %v200
        %232 = vmatpush.msra.mxu0 %v199
        %233 = vmatpush.msra.mxu0 %v198
        %234 = vmatpush.msra.mxu0 %v197
        %235 = vmatpush.msra.mxu0 %v196
        %236 = vmatpush.msra.mxu0 %v195
        %237 = vmatpush.msra.mxu0 %v194
        %238 = vmatpush.msra.mxu0 %v193
        %239 = vmatpush.msra.mxu0 %v192
        %240 = vmatpush.msra.mxu0 %v191
        %241 = vmatpush.msra.mxu0 %v190
        %242 = vmatpush.msra.mxu0 %v189
        %243 = vmatpush.msra.mxu0 %v188
        %244 = vmatpush.msra.mxu0 %v187
        %245 = vmatmul.f32.gmra.mxu0 %v206
        %v246 = vpop.f32.mrf.mxu0
        %v247 = vadd.f32 %v227, %v246
        %248 = vdwg.mxu0
        %vm249 = vcmask 519168
        %250 = vst.msk [vmem:[%s160] sm:$0xf] %vm249, %v247
        %s251 = sand.u32 %s87, 1
        %s252 = scalar_lea.sflag [#allocation3], %s251
        %s253 = sand.u32 %s87, 1
        %s254 = smul.addr %s253, 4
        %s255 = scalar_lea.vmem [#allocation2], %s254
        // Predicated region
        $region29: #{tpu_custom_call.1} parent=27 // pred_check
          %p256 = pneg %p97
        $region30: #{tpu_custom_call.1} parent=27 // pred_check_branch
          %258 = sbr.rel (%p256) target = $region32
        $region31: #{tpu_custom_call.1} parent=27 // pred_region
          %260 = vsyncadd %s252, 0
          %s261 = sadd.s32 %s21, %s20
          %s262 = smul.addr %s261, 4
          %s263 = scalar_lea.hbm %s2, %s262
          %s265 = sshll.u32 %s255, 4
          %s266 = int_to_ptr.vmem [resolvable:$true] %s265
          %s267 = sshll.u32 %s263, 4
          %s268 = int_to_ptr.hbm [resolvable:$true] %s267
          %270 = dma.vmem_to_hbm [thread:$0]  %s266, 64, %s268, %s252
        $region32: #{tpu_custom_call.1} parent=27 // pred_fallthru
          _
      $region28: #{tpu_custom_call.1} parent=5 // pred_fallthru
        _
      %p271 = scmp.le.s32.totalorder 2, %s11
      // Predicated region
      $region33: #{tpu_custom_call.1} parent=5 // pred_check
        %p272 = pneg %p271
      $region34: #{tpu_custom_call.1} parent=5 // pred_check_branch
        %274 = sbr.rel (%p272) target = $region36
      $region35: #{tpu_custom_call.1} parent=5 // pred_region
        %s275 = ssub.s32 %s11, 2
        // Predicated region
        $region37: #{tpu_custom_call.1} parent=35 // pred_check
          %p276 = pneg %p103
        $region38: #{tpu_custom_call.1} parent=35 // pred_check_branch
          %278 = sbr.rel (%p276) target = $region40
        $region39: #{tpu_custom_call.1} parent=35 // pred_region
          %s279 = sand.u32 %s88, 1
          %s280 = scalar_lea.sflag [#allocation3], %s279
          %s281 = sand.u32 %s88, 1
          %s282 = smul.addr %s281, 4
          %s283 = scalar_lea.vmem [#allocation2], %s282
          %285 = dma.done %s280, 64
        $region40: #{tpu_custom_call.1} parent=35 // pred_fallthru
          _
      $region36: #{tpu_custom_call.1} parent=5 // pred_fallthru
        _
    $region6: #{tpu_custom_call.1} parent=1 // loop_footer
      %s15 = sadd.s32 1, %s11
    $region7: #{tpu_custom_call.1} parent=1 // loop_footer_branch
      %10 = sbr.rel target = $region3
    $region8: #{tpu_custom_call.1} parent=1 // loop_exit
      _
    %286 = vsyncpa [#allocation3], 1
    %s287 = scalar_lea.sflag [#allocation3], 1
    %288 = vsyncpa %s287, 1

</llo_original>
